<compile_context>
chip_gen: v6e
topology: v6e:2x2x1
jax: 0.10.0
libtpu: 0.0.40
codegen_flags: <defaults>
</compile_context>

<pallas_src>
import jax
import jax.numpy as jnp
from jax.experimental import pallas as pl
from jax.experimental.pallas import tpu as pltpu


def sum_node_kernel(sm_ref, x_ref, Wk_ref, b_ref, o_ref, wmix_ref, bmix_ref):
    # grid = (num_batch_tiles, K): axis 0 "parallel" (batch tiles, shardable
    # across TensorCores on multi-TC parts like v7x), axis 1 "arbitrary"
    # (reduction over the K children, kept last).
    k = pl.program_id(1)
    K = pl.num_programs(1)

    @pl.when(k == 0)
    def _():
        wmix_ref[...] = jnp.zeros_like(wmix_ref)
        bmix_ref[...] = jnp.zeros_like(bmix_ref)

    # normalized mixture weight of child k: one scalar read from SMEM
    wk = sm_ref[k]

    # VPU-only accumulation of the mixed weights / bias (overlaps W[k] DMA)
    wmix_ref[...] += wk * Wk_ref[0].astype(jnp.float32)
    bmix_ref[...] += wk * b_ref[pl.ds(k, 1), :]

    @pl.when(k == K - 1)
    def _():
        x = x_ref[...]
        w_mix = wmix_ref[...].astype(x.dtype)      # bf16 MXU path when x is bf16
        o_ref[...] = (
            jnp.dot(x, w_mix, preferred_element_type=jnp.float32)
            + bmix_ref[...]
        ).astype(o_ref.dtype)


def sum_node_forward(mix_logits, x, child_W, child_b):
    """mix_logits: [K], x: [B, D_in], child_W: [K, D_in, D_out], child_b: [K, D_out].

    x / child_W keep their dtype (bf16 recommended on v6e/v7x); output is f32.
    """
    K = mix_logits.shape[0]
    B, D_in = x.shape
    D_out = child_W.shape[-1]

    # softmax over the K mixture logits, hoisted out of the grid loop
    sm = jax.nn.softmax(mix_logits.astype(jnp.float32), axis=0)    # [K]
    b_f32 = child_b.astype(jnp.float32)                            # tiny, kept resident

    # batch tiling: gives a "parallel" grid axis (v7x 2-TC sharding); the K
    # reduction axis stays last / "arbitrary".
    tb = min(B, 256)
    if B % tb != 0:
        tb = B
    grid = (B // tb, K)

    return pl.pallas_call(
        sum_node_kernel,
        out_shape=jax.ShapeDtypeStruct((B, D_out), jnp.float32),
        grid_spec=pltpu.PrefetchScalarGridSpec(
            num_scalar_prefetch=1,               # softmax weights -> SMEM
            grid=grid,
            in_specs=[
                pl.BlockSpec((tb, D_in), lambda b, k, s: (b, 0)),          # x, resident over k
                # TODO(synk): for large D_in*D_out on v7x (64 MiB VMEM) add a
                # D_out grid axis / set vmem_limit_bytes, and consider
                # pipeline_mode=pl.Buffered(3) since per-step compute is tiny.
                pl.BlockSpec((1, D_in, D_out), lambda b, k, s: (k, 0, 0)),  # W[k], streamed
                pl.BlockSpec((K, D_out), lambda b, k, s: (0, 0)),          # bias, fully resident
            ],
            out_specs=pl.BlockSpec((tb, D_out), lambda b, k, s: (b, 0)),
            scratch_shapes=[
                pltpu.VMEM((D_in, D_out), jnp.float32),   # W_mix accumulator
                pltpu.VMEM((1, D_out), jnp.float32),      # b_mix accumulator
            ],
        ),
        compiler_params=pltpu.CompilerParams(
            dimension_semantics=("parallel", "arbitrary")),
    )(sm, x, child_W, b_f32)


def sum_node_reference(mix_logits, x, child_W, child_b):
    sm = jax.nn.softmax(mix_logits.astype(jnp.float32), axis=0)
    xf = x.astype(jnp.float32)
    Wf = child_W.astype(jnp.float32)
    bf = child_b.astype(jnp.float32)
    outs = jnp.einsum('bi,kio->kbo', xf, Wf) + bf[:, None, :]
    return jnp.einsum('k,kbo->bo', sm, outs)


if __name__ == "__main__":
    K, B, D_in, D_out = 4, 8, 32, 128

    key = jax.random.PRNGKey(0)
    kx, kW, kb = jax.random.split(key, 3)

    # SumNode.__init__: self.weights = nn.Parameter(torch.ones(len(children)))
    mix_logits = jnp.ones((K,), jnp.float32)
    # Synthetic deterministic child Linear parameters; bf16 operands (halves
    # the dominant W HBM traffic, uses the bf16 MXU path), f32 accumulation.
    x = jax.random.normal(kx, (B, D_in), jnp.float32).astype(jnp.bfloat16)
    child_W = (jax.random.normal(kW, (K, D_in, D_out), jnp.float32) * 0.1).astype(jnp.bfloat16)
    child_b = (jax.random.normal(kb, (K, D_out), jnp.float32) * 0.1).astype(jnp.bfloat16)

    out = sum_node_forward(mix_logits, x, child_W, child_b)
    out = jax.block_until_ready(out)

    ref = sum_node_reference(mix_logits, x, child_W, child_b)
    assert out.shape == (B, D_out)
    assert jnp.allclose(out, ref, atol=2e-2, rtol=2e-2), "mismatch vs reference"

    print("KERNEL_OK")
</pallas_src>

<mosaic_0001>
module attributes {stable_mosaic.version = 11 : i64} {
  func.func @sum_node_kernel(%arg0: i32, %arg1: i32, %arg2: memref<4xf32, #tpu.memory_space<smem>>, %arg3: memref<8x32xbf16, #tpu.memory_space<vmem>>, %arg4: memref<1x32x128xbf16, #tpu.memory_space<vmem>>, %arg5: memref<4x128xf32, #tpu.memory_space<vmem>>, %arg6: memref<8x128xf32, #tpu.memory_space<vmem>>, %arg7: memref<32x128xf32, #tpu.memory_space<vmem>>, %arg8: memref<1x128xf32, #tpu.memory_space<vmem>>) attributes {dimension_semantics = [#tpu.dimension_semantics<parallel>, #tpu.dimension_semantics<arbitrary>], iteration_bounds = array<i64: 1, 4>, scalar_prefetch = 1 : i64, scratch_operands = 2 : i64, tpu.core_type = #tpu.core_type<tc>, window_params = [{transform_indices = @transform_0, window_bounds = array<i64: 8, 32>}, {transform_indices = @transform_1, window_bounds = array<i64: 1, 32, 128>}, {pipeline_mode = #tpu.pipeline_mode<synchronous>, transform_indices = @transform_2, window_bounds = array<i64: 4, 128>}, {transform_indices = @transform_3, window_bounds = array<i64: 8, 128>}]} {
    %c0_i32 = arith.constant 0 : i32
    %0 = arith.cmpi eq, %arg1, %c0_i32 : i32
    %1 = arith.extui %0 : i1 to i32
    %c0_i32_0 = arith.constant 0 : i32
    %2 = arith.cmpi ne, %1, %c0_i32_0 : i32
    scf.if %2 {
      %cst = arith.constant 0.000000e+00 : f32
      %23 = vector.broadcast %cst : f32 to vector<32x128xf32>
      %c0_13 = arith.constant 0 : index
      %c0_14 = arith.constant 0 : index
      %24 = vector.load %arg7[%c0_13, %c0_14] : memref<32x128xf32, #tpu.memory_space<vmem>>, vector<32x128xf32>
      tpu.vector_store %arg7[%c0_13, %c0_14], %23 {strides = array<i32>} : memref<32x128xf32, #tpu.memory_space<vmem>>, vector<32x128xf32>,
      %cst_15 = arith.constant 0.000000e+00 : f32
      %25 = vector.broadcast %cst_15 : f32 to vector<1x128xf32>
      %c0_16 = arith.constant 0 : index
      %c0_17 = arith.constant 0 : index
      %26 = vector.load %arg8[%c0_16, %c0_17] : memref<1x128xf32, #tpu.memory_space<vmem>>, vector<1x128xf32>
      tpu.vector_store %arg8[%c0_16, %c0_17], %25 {strides = array<i32>} : memref<1x128xf32, #tpu.memory_space<vmem>>, vector<1x128xf32>,
    } else {
    }
    %3 = arith.index_cast %arg1 : i32 to index
    %4 = memref.load %arg2[%3] : memref<4xf32, #tpu.memory_space<smem>>
    %c0 = arith.constant 0 : index
    %c0_1 = arith.constant 0 : index
    %5 = vector.load %arg7[%c0, %c0_1] : memref<32x128xf32, #tpu.memory_space<vmem>>, vector<32x128xf32>
    %c0_2 = arith.constant 0 : index
    %c0_3 = arith.constant 0 : index
    %c0_4 = arith.constant 0 : index
    %6 = vector.load %arg4[%c0_2, %c0_3, %c0_4] : memref<1x32x128xbf16, #tpu.memory_space<vmem>>, vector<1x32x128xbf16>
    %7 = vector.shape_cast %6 : vector<1x32x128xbf16> to vector<32x128xbf16>
    %8 = arith.extf %7 : vector<32x128xbf16> to vector<32x128xf32>
    %9 = vector.broadcast %4 : f32 to vector<32x128xf32>
    %10 = arith.mulf %9, %8 : vector<32x128xf32>
    %11 = arith.addf %5, %10 : vector<32x128xf32>
    %c0_5 = arith.constant 0 : index
    %c0_6 = arith.constant 0 : index
    %12 = vector.load %arg7[%c0_5, %c0_6] : memref<32x128xf32, #tpu.memory_space<vmem>>, vector<32x128xf32>
    tpu.vector_store %arg7[%c0_5, %c0_6], %11 {strides = array<i32>} : memref<32x128xf32, #tpu.memory_space<vmem>>, vector<32x128xf32>,
    %c0_7 = arith.constant 0 : index
    %c0_8 = arith.constant 0 : index
    %13 = vector.load %arg8[%c0_7, %c0_8] : memref<1x128xf32, #tpu.memory_space<vmem>>, vector<1x128xf32>
    %14 = arith.index_cast %arg1 : i32 to index
    %c0_9 = arith.constant 0 : index
    %15 = vector.load %arg5[%14, %c0_9] : memref<4x128xf32, #tpu.memory_space<vmem>>, vector<1x128xf32>
    %16 = vector.broadcast %4 : f32 to vector<1x128xf32>
    %17 = arith.mulf %16, %15 : vector<1x128xf32>
    %18 = arith.addf %13, %17 : vector<1x128xf32>
    %c0_10 = arith.constant 0 : index
    %c0_11 = arith.constant 0 : index
    %19 = vector.load %arg8[%c0_10, %c0_11] : memref<1x128xf32, #tpu.memory_space<vmem>>, vector<1x128xf32>
    tpu.vector_store %arg8[%c0_10, %c0_11], %18 {strides = array<i32>} : memref<1x128xf32, #tpu.memory_space<vmem>>, vector<1x128xf32>,
    %c3_i32 = arith.constant 3 : i32
    %20 = arith.cmpi eq, %arg1, %c3_i32 : i32
    %21 = arith.extui %20 : i1 to i32
    %c0_i32_12 = arith.constant 0 : i32
    %22 = arith.cmpi ne, %21, %c0_i32_12 : i32
    scf.if %22 {
      %c0_13 = arith.constant 0 : index
      %c0_14 = arith.constant 0 : index
      %23 = vector.load %arg3[%c0_13, %c0_14] : memref<8x32xbf16, #tpu.memory_space<vmem>>, vector<8x32xbf16>
      %c0_15 = arith.constant 0 : index
      %c0_16 = arith.constant 0 : index
      %24 = vector.load %arg7[%c0_15, %c0_16] : memref<32x128xf32, #tpu.memory_space<vmem>>, vector<32x128xf32>
      %25 = arith.truncf %24 : vector<32x128xf32> to vector<32x128xbf16>
      %cst = arith.constant dense<0.000000e+00> : vector<8x128xf32>
      %26 = tpu.matmul %23, %25, %cst {dimension_numbers = #tpu.dot_dimension_numbers<[1], [0], [0], [1], [0, 0, 1, 1], [], []>} : vector<8x32xbf16>, vector<32x128xbf16>, vector<8x128xf32> -> vector<8x128xf32>
      %c0_17 = arith.constant 0 : index
      %c0_18 = arith.constant 0 : index
      %27 = vector.load %arg8[%c0_17, %c0_18] : memref<1x128xf32, #tpu.memory_space<vmem>>, vector<1x128xf32>
      %28 = vector.broadcast %27 : vector<1x128xf32> to vector<8x128xf32>
      %29 = arith.addf %26, %28 : vector<8x128xf32>
      %c0_19 = arith.constant 0 : index
      %c0_20 = arith.constant 0 : index
      %30 = vector.load %arg6[%c0_19, %c0_20] : memref<8x128xf32, #tpu.memory_space<vmem>>, vector<8x128xf32>
      tpu.vector_store %arg6[%c0_19, %c0_20], %29 {strides = array<i32>} : memref<8x128xf32, #tpu.memory_space<vmem>>, vector<8x128xf32>,
    } else {
    }
    return
  }
  func.func @transform_0(%arg0: i32, %arg1: i32, %arg2: memref<4xf32, #tpu.memory_space<smem>>) -> (i32, i32) {
    %c0_i32 = arith.constant 0 : i32
    %c0_i32_0 = arith.constant 0 : i32
    return %arg0, %c0_i32 : i32, i32
  }
  func.func @transform_1(%arg0: i32, %arg1: i32, %arg2: memref<4xf32, #tpu.memory_space<smem>>) -> (i32, i32, i32) {
    %c0_i32 = arith.constant 0 : i32
    %c0_i32_0 = arith.constant 0 : i32
    %c0_i32_1 = arith.constant 0 : i32
    return %arg1, %c0_i32, %c0_i32_0 : i32, i32, i32
  }
  func.func @transform_2(%arg0: i32, %arg1: i32, %arg2: memref<4xf32, #tpu.memory_space<smem>>) -> (i32, i32) {
    %c0_i32 = arith.constant 0 : i32
    %c0_i32_0 = arith.constant 0 : i32
    %c0_i32_1 = arith.constant 0 : i32
    return %c0_i32, %c0_i32_0 : i32, i32
  }
  func.func @transform_3(%arg0: i32, %arg1: i32, %arg2: memref<4xf32, #tpu.memory_space<smem>>) -> (i32, i32) {
    %c0_i32 = arith.constant 0 : i32
    %c0_i32_0 = arith.constant 0 : i32
    return %arg0, %c0_i32 : i32, i32
  }
}

</mosaic_0001>

<llo_original>
// kernel: tpu_custom_call.1
$region0: #{tpu_custom_call.1}
  #allocation0 [shape = 'u32[]', space=smem, size = 0x4, offset = 0x4, fixed_abs, tag = 'smem constant byte address 0x4 - core index']
  #allocation1 [shape = 'u32[144,128]{1,0:T(1,128)}', space=vmem, size = 0x12000, scoped, tag = 'internal scratch']
  #allocation2 [shape = 'f32[32,128]{1,0:T(8,128)}', space=vmem, size = 0x4000, scoped, tag = 'scratch operand']
  #allocation3 [shape = 'f32[1,128]{1,0:T(1,128)}', space=vmem, size = 0x200, scoped, tag = 'scratch operand']
  #allocation4 [shape = 's32[1]{0}', space=sflag, size = 0x4, scoped, tag = 'scoped memory for tpu_custom_call.1']
  #allocation5 [shape = 'u8[512]{0}', space=smem, size = 0x200, scoped, tag = 'prefetched SMEM operand 0']
  %s0 = inlined_call_operand.hbm [shape: f32[4], index: 0, kind: input, shape index: {}]
  %s1 = inlined_call_operand.hbm [shape: bf16[8,32], index: 1, kind: input, shape index: {}]
  %s2 = inlined_call_operand.hbm [shape: bf16[4,32,128], index: 2, kind: input, shape index: {}]
  %s3 = inlined_call_operand.vmem [shape: f32[4,128], index: 3, kind: input, shape index: {}]
  %s4 = inlined_call_operand.hbm [shape: f32[8,128], index: 4, kind: output, shape index: {}]
  %s5 = sld [smem:[#allocation0]]
  $region61: #{tpu_custom_call.1} parent=0
    _
  %s7 = ssub.s32 1, %s5
  %s8 = scalar_select 0, %s7, %s5
  %10 = dma.hbm_to_smem %s0, 16, [#allocation5], [#allocation4]
  %11 = dma.done [#allocation4], 16
  %12 = sfence
  $region1: #{tpu_custom_call.1} parent=0
    #allocation6 [shape = 'u8[2048]{0}', space=vmem, size = 0x800, scoped, tag = 'input window, operand 1, single buffered']
    #allocation7 [shape = 's32[2]{0}', space=sflag, size = 0x8, scoped, tag = 'scoped memory for tpu_custom_call.1']
    #allocation8 [shape = 's32[2]{0}', space=sflag, size = 0x8, scoped, tag = 'scoped memory for tpu_custom_call.1']
    #allocation9 [shape = 'u8[16384]{0}', space=vmem, size = 0x4000, scoped, tag = 'input window, operand 2']
    #allocation10 [shape = 's32[2]{0}', space=sflag, size = 0x8, scoped, tag = 'scoped memory for tpu_custom_call.1']
    #allocation11 [shape = 'u8[4096]{0}', space=vmem, size = 0x1000, scoped, tag = 'output window, operand 0, single buffered']
    %13 = vsyncpa [#allocation7], 0
    %14 = vsyncpa [#allocation10], 0
    %s15 = scalar_lea.sflag [#allocation10], 1
    %16 = vsyncpa %s15, 0
    %17 = vsyncpa [#allocation8], 0
    loop: start=0, step=1, limit=6
    $region2: #{tpu_custom_call.1} parent=1 // loop_pre_header
      _
    $region3: #{tpu_custom_call.1} parent=1 // loop_header
      %s19 = sphi 0, %s23
      %p20 = scmp.ge.s32.totalorder %s19, 6
      %s26 = sphi 0, %s38
      %s27 = sphi 0, %s34
      %s28 = sphi 0, %s26
      %s29 = sphi 0, %s27
      %s30 = sphi 0, %s28
      %s31 = sphi 0, %s29
      %s41 = sphi 0, %s43
      %s44 = sphi 0, %s41
      %s45 = sphi 0, %s44
      %s61 = sphi 0, %s45
      %s67 = sphi 0, %s69
      %s70 = sphi 0, %s67
      %s71 = sphi 0, %s70
      %s87 = sphi 0, %s71
      %s91 = sphi 0, %s91
      %s93 = sphi 0, %s91
      %s94 = sphi 0, %s93
      %s108 = sphi 0, %s94
      %s114 = sphi 0, %s116
      %s117 = sphi 0, %s114
      %s118 = sphi 0, %s117
      %s134 = sphi 0, %s118
    $region4: #{tpu_custom_call.1} parent=1 // loop_header_branch
      %22 = sbr.rel (%p20) target = $region8
    $region5: #{tpu_custom_call.1} parent=1 // loop_body
      %s24 = ssub.s32 %s19, 1
      %s25 = ssub.s32 %s19, 2
      %s32 = sadd.s32 1, %s27
      %p33 = scmp.ge.s32.totalorder %s32, 4
      %s34 = scalar_select %p33, 0, %s32
      %s35 = sadd.s32 1, %s26
      %s36 = scalar_select %p33, %s35, %s26
      %p37 = scmp.ge.s32.totalorder %s36, 1
      %s38 = scalar_select %p37, 0, %s36
      %s39 = ssub.s32 %s26, %s38
      %p40 = scmp.eq.s32.totalorder %s39, 0
      %s42 = sadd.s32 %s41, 1
      %s43 = scalar_select %p40, %s41, %s42
      %p46 = pneg %p40
      %p47 = scmp.eq.s32.totalorder %s19, 3
      %p48 = por %p46, %p47
      %p49 = scmp.ne.s32.totalorder %s41, %s44
      %p50 = scmp.eq.s32.totalorder %s19, 0
      %p51 = por %p49, %p50
      %p52 = scmp.ne.s32.totalorder %s41, %s44
      %p53 = scmp.eq.s32.totalorder %s24, 3
      %p54 = por %p52, %p53
      %p55 = scmp.ne.s32.totalorder %s44, %s45
      %p56 = scmp.eq.s32.totalorder %s24, 0
      %p57 = por %p55, %p56
      %p58 = scmp.ne.s32.totalorder %s44, %s45
      %p59 = scmp.eq.s32.totalorder %s25, 3
      %p60 = por %p58, %p59
      %p62 = scmp.ne.s32.totalorder %s45, %s61
      %p63 = scmp.eq.s32.totalorder %s25, 0
      %p64 = por %p62, %p63
      %s65 = ssub.s32 %s27, %s34
      %p66 = scmp.eq.s32.totalorder %s65, 0
      %s68 = sadd.s32 %s67, 1
      %s69 = scalar_select %p66, %s67, %s68
      %p72 = pneg %p66
      %p73 = scmp.eq.s32.totalorder %s19, 3
      %p74 = por %p72, %p73
      %p75 = scmp.ne.s32.totalorder %s67, %s70
      %p76 = scmp.eq.s32.totalorder %s19, 0
      %p77 = por %p75, %p76
      %p78 = scmp.ne.s32.totalorder %s67, %s70
      %p79 = scmp.eq.s32.totalorder %s24, 3
      %p80 = por %p78, %p79
      %p81 = scmp.ne.s32.totalorder %s70, %s71
      %p82 = scmp.eq.s32.totalorder %s24, 0
      %p83 = por %p81, %p82
      %p84 = scmp.ne.s32.totalorder %s70, %s71
      %p85 = scmp.eq.s32.totalorder %s25, 3
      %p86 = por %p84, %p85
      %p88 = scmp.ne.s32.totalorder %s71, %s87
      %p89 = scmp.eq.s32.totalorder %s25, 0
      %p90 = por %p88, %p89
      %s92 = sadd.s32 %s91, 1
      %p95 = scmp.eq.s32.totalorder %s19, 3
      %p96 = scmp.ne.s32.totalorder %s91, %s93
      %p97 = scmp.eq.s32.totalorder %s19, 0
      %p98 = por %p96, %p97
      %p99 = scmp.ne.s32.totalorder %s91, %s93
      %p100 = scmp.eq.s32.totalorder %s24, 3
      %p101 = por %p99, %p100
      %p102 = scmp.ne.s32.totalorder %s93, %s94
      %p103 = scmp.eq.s32.totalorder %s24, 0
      %p104 = por %p102, %p103
      %p105 = scmp.ne.s32.totalorder %s93, %s94
      %p106 = scmp.eq.s32.totalorder %s25, 3
      %p107 = por %p105, %p106
      %p109 = scmp.ne.s32.totalorder %s94, %s108
      %p110 = scmp.eq.s32.totalorder %s25, 0
      %p111 = por %p109, %p110
      %s112 = ssub.s32 %s26, %s38
      %p113 = scmp.eq.s32.totalorder %s112, 0
      %s115 = sadd.s32 %s114, 1
      %s116 = scalar_select %p113, %s114, %s115
      %p119 = pneg %p113
      %p120 = scmp.eq.s32.totalorder %s19, 3
      %p121 = por %p119, %p120
      %p122 = scmp.ne.s32.totalorder %s114, %s117
      %p123 = scmp.eq.s32.totalorder %s19, 0
      %p124 = por %p122, %p123
      %p125 = scmp.ne.s32.totalorder %s114, %s117
      %p126 = scmp.eq.s32.totalorder %s24, 3
      %p127 = por %p125, %p126
      %p128 = scmp.ne.s32.totalorder %s117, %s118
      %p129 = scmp.eq.s32.totalorder %s24, 0
      %p130 = por %p128, %p129
      %p131 = scmp.ne.s32.totalorder %s117, %s118
      %p132 = scmp.eq.s32.totalorder %s25, 3
      %p133 = por %p131, %p132
      %p135 = scmp.ne.s32.totalorder %s118, %s134
      %p136 = scmp.eq.s32.totalorder %s25, 0
      %p137 = por %p135, %p136
      %p138 = scmp.le.s32.totalorder 1, %s19
      %p139 = scmp.lt.s32.totalorder %s19, 5
      %p140 = pnand %p138, %p139
      %p141 = pneg %p140
      // Predicated region
      $region9: #{tpu_custom_call.1} parent=5 // pred_check
        _
      $region10: #{tpu_custom_call.1} parent=5 // pred_check_branch
        %143 = sbr.rel (%p140) target = $region12
      $region11: #{tpu_custom_call.1} parent=5 // pred_region
        %s144 = ssub.s32 %s19, 1
        // Predicated region
        $region13: #{tpu_custom_call.1} parent=11 // pred_check
          %p145 = pneg %p57
        $region14: #{tpu_custom_call.1} parent=11 // pred_check_branch
          %147 = sbr.rel (%p145) target = $region16
        $region15: #{tpu_custom_call.1} parent=11 // pred_region
          %s149 = ssub.s32 64, 64
          %150 = vsyncadd [#allocation7], %s149
          %s151 = smul.addr %s28, 64
          %s152 = scalar_lea.hbm %s1, %s151
          %s154 = sshll.u32 [#allocation6], 4
          %s155 = int_to_ptr.vmem [resolvable:$true] %s154
          %157 = dma.hbm_to_vmem [thread:$0]  %s152, 64, %s155, [#allocation7]
        $region16: #{tpu_custom_call.1} parent=11 // pred_fallthru
          _
        // Predicated region
        $region17: #{tpu_custom_call.1} parent=11 // pred_check
          %p158 = pneg %p104
        $region18: #{tpu_custom_call.1} parent=11 // pred_check_branch
          %160 = sbr.rel (%p158) target = $region20
        $region19: #{tpu_custom_call.1} parent=11 // pred_region
          _
        $region20: #{tpu_custom_call.1} parent=11 // pred_fallthru
          _
      $region12: #{tpu_custom_call.1} parent=5 // pred_fallthru
        _
      %p161 = scmp.lt.s32.totalorder %s19, 4
      // Predicated region
      $region21: #{tpu_custom_call.1} parent=5 // pred_check
        %p162 = pneg %p161
      $region22: #{tpu_custom_call.1} parent=5 // pred_check_branch
        %164 = sbr.rel (%p162) target = $region24
      $region23: #{tpu_custom_call.1} parent=5 // pred_region
        // Predicated region
        $region25: #{tpu_custom_call.1} parent=23 // pred_check
          %p165 = pneg %p77
        $region26: #{tpu_custom_call.1} parent=23 // pred_check_branch
          %167 = sbr.rel (%p165) target = $region28
        $region27: #{tpu_custom_call.1} parent=23 // pred_region
          %s168 = sand.u32 %s67, 1
          %s169 = scalar_lea.sflag [#allocation10], %s168
          %s170 = sand.u32 %s67, 1
          %s171 = smul.addr %s170, 16
          %s172 = scalar_lea.vmem [#allocation9], %s171
          %s174 = ssub.s32 256, 256
          %175 = vsyncadd %s169, %s174
          %s176 = smul.addr %s27, 4
          %s177 = smul.addr %s176, 64
          %s178 = scalar_lea.hbm %s2, %s177
          %s179 = sshll.u32 %s172, 4
          %s180 = int_to_ptr.vmem [resolvable:$true] %s179
          %185 = dma.hbm_to_vmem [thread:$0]  %s178, 256, %s180, %s169, 64, 64, 4
        $region28: #{tpu_custom_call.1} parent=23 // pred_fallthru
          _
      $region24: #{tpu_custom_call.1} parent=5 // pred_fallthru
        _
      %p186 = scmp.le.s32.totalorder 1, %s19
      %p187 = scmp.lt.s32.totalorder %s19, 5
      %p188 = pnand %p186, %p187
      %p189 = pneg %p188
      // Predicated region
      $region29: #{tpu_custom_call.1} parent=5 // pred_check
        _
      $region30: #{tpu_custom_call.1} parent=5 // pred_check_branch
        %191 = sbr.rel (%p188) target = $region32
      $region31: #{tpu_custom_call.1} parent=5 // pred_region
        %s192 = ssub.s32 %s19, 1
        // Predicated region
        $region33: #{tpu_custom_call.1} parent=31 // pred_check
          %p193 = pneg %p57
        $region34: #{tpu_custom_call.1} parent=31 // pred_check_branch
          %195 = sbr.rel (%p193) target = $region36
        $region35: #{tpu_custom_call.1} parent=31 // pred_region
          %196 = dma.done [#allocation7], 64
        $region36: #{tpu_custom_call.1} parent=31 // pred_fallthru
          _
        %s197 = sand.u32 %s70, 1
        %s198 = scalar_lea.sflag [#allocation10], %s197
        %s199 = sand.u32 %s70, 1
        %s200 = smul.addr %s199, 16
        %s201 = scalar_lea.vmem [#allocation9], %s200
        // Predicated region
        $region37: #{tpu_custom_call.1} parent=31 // pred_check
          %p202 = pneg %p83
        $region38: #{tpu_custom_call.1} parent=31 // pred_check_branch
          %204 = sbr.rel (%p202) target = $region40
        $region39: #{tpu_custom_call.1} parent=31 // pred_region
          %205 = dma.done %s198, 256
        $region40: #{tpu_custom_call.1} parent=31 // pred_fallthru
          _
        %p206 = pneg %p57
        %p207 = pneg %p54
        %s208 = sand.u32 %s70, 1
        %s209 = scalar_lea.sflag [#allocation10], %s208
        %s210 = sand.u32 %s70, 1
        %s211 = smul.addr %s210, 16
        %s212 = scalar_lea.vmem [#allocation9], %s211
        %p213 = pneg %p83
        %p214 = pneg %p80
        %p215 = pneg %p104
        %p216 = pneg %p101
        %p217 = pneg %p130
        %p218 = pneg %p127
        %p220 = scmp.eq.s32.totalorder %s29, 0
        // Predicated region
        $region41: #{tpu_custom_call.1} parent=31 // pred_check
          %p221 = pneg %p220
        $region42: #{tpu_custom_call.1} parent=31 // pred_check_branch
          %223 = sbr.rel (%p221) target = $region44
        $region43: #{tpu_custom_call.1} parent=31 // pred_region
          %224 = vst [vmem:[#allocation2] sm:$0xff] 0.0
          %225 = vst [vmem:[#allocation2 + $0x8] sm:$0xff] 0.0
          %226 = vst [vmem:[#allocation2 + $0x10] sm:$0xff] 0.0
          %227 = vst [vmem:[#allocation2 + $0x18] sm:$0xff] 0.0
          %228 = vst [vmem:[#allocation3] sm:$0x1] 0.0
        $region44: #{tpu_custom_call.1} parent=31 // pred_fallthru
          _
        %s229 = sld [smem:[#allocation5 + %s29]]
        %v230 = vld [vmem:[#allocation2] sm:$0xff]
        %v231 = vld [vmem:[#allocation2 + $0x8] sm:$0xff]
        %v232 = vld [vmem:[#allocation2 + $0x10] sm:$0xff]
        %v233 = vld [vmem:[#allocation2 + $0x18] sm:$0xff]
        %v234 = vld [vmem:[%s201] sm:$0xf]
        %v235 = vld [vmem:[%s201 + $0x4] sm:$0xf]
        %v236 = vld [vmem:[%s201 + $0x8] sm:$0xf]
        %v237 = vld [vmem:[%s201 + $0xc] sm:$0xf]
        %v238 = vunpack.c.l.bf16 %v234
        %v239 = vunpack.c.l.bf16 %v235
        %v240 = vunpack.c.l.bf16 %v236
        %v241 = vunpack.c.l.bf16 %v237
        %v242 = vstv %s229
        %v243 = vmul.f32 %v242, %v238
        %v244 = vmul.f32 %v242, %v239
        %v245 = vmul.f32 %v242, %v240
        %v246 = vmul.f32 %v242, %v241
        %v247 = vadd.f32 %v230, %v243
        %v248 = vadd.f32 %v231, %v244
        %v249 = vadd.f32 %v232, %v245
        %v250 = vadd.f32 %v233, %v246
        %251 = vst [vmem:[#allocation2] sm:$0xff] %v247
        %252 = vst [vmem:[#allocation2 + $0x8] sm:$0xff] %v248
        %253 = vst [vmem:[#allocation2 + $0x10] sm:$0xff] %v249
        %254 = vst [vmem:[#allocation2 + $0x18] sm:$0xff] %v250
        %v255 = vld [vmem:[#allocation3] sm:$0x1]
        %s256 = scalar_lea.vmem %s3, %s29
        %v257 = vld [vmem:[%s256] sm:$0x1]
        %v258 = vmul.f32 %v242, %v257
        %v259 = vadd.f32 %v255, %v258
        %260 = vst [vmem:[#allocation3] sm:$0x1] %v259
        %p261 = scmp.eq.s32.totalorder %s29, 3
        // Predicated region
        $region45: #{tpu_custom_call.1} parent=31 // pred_check
          %p262 = pneg %p261
        $region46: #{tpu_custom_call.1} parent=31 // pred_check_branch
          %264 = sbr.rel (%p262) target = $region48
        $region47: #{tpu_custom_call.1} parent=31 // pred_region
          %v265 = vld [vmem:[#allocation6] sm:$0xf]
          %v266 = vld [vmem:[#allocation2] sm:$0xff]
          %v267 = vld [vmem:[#allocation2 + $0x8] sm:$0xff]
          %v268 = vld [vmem:[#allocation2 + $0x10] sm:$0xff]
          %v269 = vld [vmem:[#allocation2 + $0x18] sm:$0xff]
          %v270 = vpack.c.bf16 %v267, %v266
          %v271 = vpack.c.bf16 %v269, %v268
          %v272 = vld [vmem:[#allocation3] sm:$0x1]
          %v274 = vlaneseq
          %v275 = vshrl.u32 %v274, 7
          %v276 = vsub.s32 0, %v275
          %v277 = vrot.slane %v272, %v276
          %vm279 = vcmask 261120
          %v281 = vsel %vm279, %v265, 0
          %283 = vmatprep.subr.bf16.mxu0 0
          %284 = vmatpush1.bf16.msra.mxu0 0
          %285 = vmatprep.subr.bf16.mxu0 0
          %286 = vmatpush1.bf16.msra.mxu0 0
          %287 = vmatprep.subr.bf16.mxu0 0
          %288 = vmatpush1.bf16.msra.mxu0 0
          %289 = vmatprep.subr.bf16.mxu0 0
          %290 = vmatpush1.bf16.msra.mxu0 0
          %291 = vmatprep.subr.bf16.mxu0 0
          %292 = vmatpush1.bf16.msra.mxu0 0
          %293 = vmatprep.subr.bf16.mxu0 0
          %294 = vmatpush1.bf16.msra.mxu0 0
          %295 = vmatprep.subr.bf16.mxu0 0
          %296 = vmatpush1.bf16.msra.mxu0 %v271
          %297 = vmatprep.subr.bf16.mxu0 0
          %298 = vmatpush1.bf16.msra.mxu0 %v270
          %299 = vmatprep.subr.bf16.mxu0 0
          %300 = vmatpush2.bf16.msra.mxu0 0
          %301 = vmatprep.subr.bf16.mxu0 0
          %302 = vmatpush2.bf16.msra.mxu0 0
          %303 = vmatprep.subr.bf16.mxu0 0
          %304 = vmatpush2.bf16.msra.mxu0 0
          %305 = vmatprep.subr.bf16.mxu0 0
          %306 = vmatpush2.bf16.msra.mxu0 0
          %307 = vmatprep.subr.bf16.mxu0 0
          %308 = vmatpush2.bf16.msra.mxu0 0
          %309 = vmatprep.subr.bf16.mxu0 0
          %310 = vmatpush2.bf16.msra.mxu0 0
          %311 = vmatprep.subr.bf16.mxu0 0
          %312 = vmatpush2.bf16.msra.mxu0 0
          %313 = vmatprep.subr.bf16.mxu0 0
          %314 = vmatpush2.bf16.msra.mxu0 0
          %315 = vmatprep.mubr.bf16.mxu0 0
          %316 = vmatmul.mubr.bf16.gmra.mxu0 %v281
          %v317 = vpop.f32.mrf.mxu0
          %v318 = vadd.f32 %v277, %v317
          %v319 = vpop.f32.mrf.mxu0
          %v320 = vpop.f32.mrf.mxu0
          %v321 = vpop.f32.mrf.mxu0
          %322 = vdwg.mxu0
          %323 = vst [vmem:[#allocation11] sm:$0xff] %v318
        $region48: #{tpu_custom_call.1} parent=31 // pred_fallthru
          _
        // Predicated region
        $region49: #{tpu_custom_call.1} parent=31 // pred_check
          %p324 = pneg %p127
        $region50: #{tpu_custom_call.1} parent=31 // pred_check_branch
          %326 = sbr.rel (%p324) target = $region52
        $region51: #{tpu_custom_call.1} parent=31 // pred_region
          %s328 = ssub.s32 128, 128
          %329 = vsyncadd [#allocation8], %s328
          %s330 = smul.addr %s28, 128
          %s331 = scalar_lea.hbm %s4, %s330
          %s333 = sshll.u32 [#allocation11], 4
          %s334 = int_to_ptr.vmem [resolvable:$true] %s333
          %336 = dma.vmem_to_hbm [thread:$0]  %s334, 128, %s331, [#allocation8]
        $region52: #{tpu_custom_call.1} parent=31 // pred_fallthru
          _
        // Predicated region
        $region53: #{tpu_custom_call.1} parent=31 // pred_check
          %p337 = pneg %p127
        $region54: #{tpu_custom_call.1} parent=31 // pred_check_branch
          %339 = sbr.rel (%p337) target = $region56
        $region55: #{tpu_custom_call.1} parent=31 // pred_region
          %340 = dma.done [#allocation8], 128
        $region56: #{tpu_custom_call.1} parent=31 // pred_fallthru
          _
      $region32: #{tpu_custom_call.1} parent=5 // pred_fallthru
        _
      %p341 = scmp.le.s32.totalorder 2, %s19
      // Predicated region
      $region57: #{tpu_custom_call.1} parent=5 // pred_check
        %p342 = pneg %p341
      $region58: #{tpu_custom_call.1} parent=5 // pred_check_branch
        %344 = sbr.rel (%p342) target = $region60
      $region59: #{tpu_custom_call.1} parent=5 // pred_region
        %s345 = ssub.s32 %s19, 2
      $region60: #{tpu_custom_call.1} parent=5 // pred_fallthru
        _
    $region6: #{tpu_custom_call.1} parent=1 // loop_footer
      %s23 = sadd.s32 1, %s19
    $region7: #{tpu_custom_call.1} parent=1 // loop_footer_branch
      %18 = sbr.rel target = $region3
    $region8: #{tpu_custom_call.1} parent=1 // loop_exit
      _
    %346 = vsyncpa [#allocation7], 1
    %s347 = scalar_lea.sflag [#allocation7], 1
    %348 = vsyncpa %s347, 1
    %349 = vsyncpa [#allocation10], 1
    %s350 = scalar_lea.sflag [#allocation10], 1
    %351 = vsyncpa %s350, 1
    %352 = vsyncpa [#allocation8], 1
    %s353 = scalar_lea.sflag [#allocation8], 1
    %354 = vsyncpa %s353, 1

</llo_original>
